<compile_context>
chip_gen: v5e
topology: v5e:2x2
jax: 0.10.0
libtpu: 0.0.40
codegen_flags: <defaults>
</compile_context>

<pallas_src>
import functools

import jax
import jax.numpy as jnp
from jax.experimental import pallas as pl
from jax.experimental.pallas import tpu as pltpu


def _char_encoder_kernel(ids_ref, table_ref, *args,
                         dilations, kernel_size, mxu_dtype):
    """One block of Bt batch elements per grid step.

    ids_ref   : (Bt, L, 1) int32      character ids
    table_ref : (V, E)     f32        embedding table
    args      : w0, b0, w1, b1, ..., out_ref
                w_i : (k*C_in, C_out) f32   (im2col-flattened conv weight)
                b_i : (1, C_out)      f32
    out_ref   : (Bt, L, E + C_last)
    """
    out_ref = args[-1]
    layer_refs = args[:-1]
    n_layers = len(dilations)
    k = kernel_size

    Bt, L, _ = ids_ref.shape
    V, E = table_ref.shape
    M = Bt * L                                    # matmul M dim (all block rows)

    # ---- Embedding lookup as a one-hot matmul (MXU-friendly gather). ----
    # Kept in the table dtype: the embedding half of the output must be a
    # verbatim copy of the table rows (torch.cat), so no bf16 rounding here.
    ids = ids_ref[...].reshape(M, 1)
    vocab_iota = jax.lax.broadcasted_iota(jnp.int32, (M, V), 1)
    onehot = (vocab_iota == ids).astype(table_ref.dtype)            # (M, V)
    emb = jnp.dot(onehot, table_ref[...],
                  preferred_element_type=jnp.float32)               # (M, E)
    emb3 = emb.reshape(Bt, L, E)

    # TODO(synk): emb_dropout / per-layer Dropout are eval-mode identities;
    # training-mode dropout would need pltpu.prng_seed / prng_random_bits.

    # Hoisted position iota reused by every tap's validity mask.
    t_iota = jax.lax.broadcasted_iota(jnp.int32, (Bt, L, 1), 1)

    # ---- Dilated ConvNet, channels-last, im2col: ONE matmul per layer. ----
    x = emb3                                                        # (Bt, L, C_in)
    for i in range(n_layers):
        w_ref = layer_refs[2 * i]                                   # (k*C_in, C_out)
        b_ref = layer_refs[2 * i + 1]                               # (1, C_out)
        c_in = x.shape[-1]
        c_out = w_ref.shape[1]
        d = dilations[i]
        p = d * (k - 1) // 2                                        # 'same' padding

        taps = []
        for j in range(k):
            o = j * d - p                                           # temporal offset
            if o == 0:
                taps.append(x)
            else:
                # Per-sequence shift via an XLU sublane rotate + zero mask;
                # implements the conv's zero padding without any O(L^2)
                # shift-matrix matmul and without touching the VALU matmuls.
                rolled = pltpu.roll(x, shift=(-o) % L, axis=1)
                valid = jnp.logical_and(t_iota + o >= 0, t_iota + o < L)
                taps.append(jnp.where(valid, rolled, 0.0))
        xs_all = jnp.concatenate(taps, axis=-1)                     # (Bt, L, k*C_in)

        acc = jnp.dot(xs_all.reshape(M, k * c_in).astype(mxu_dtype),
                      w_ref[...].astype(mxu_dtype),
                      preferred_element_type=jnp.float32)           # (M, C_out)
        x = jnp.maximum(acc + b_ref[...], 0.0).reshape(Bt, L, c_out)

    # torch.cat((embeddings, conv_out), 1).transpose(1, 2) == channels-last
    # concat.  Build the full tile in registers and write it with ONE store
    # starting at lane 0 (no partial store at a lane offset).
    out_ref[...] = jnp.concatenate([emb3, x], axis=-1).astype(out_ref.dtype)


def _pick_block_batch(batch, seq_len, max_rows=512):
    """Largest divisor Bt of `batch` such that Bt*L matmul rows stay moderate
    and the grid keeps >= 2 steps (feeds both TensorCores on v7x)."""
    best = 1
    for bt in range(1, batch + 1):
        if batch % bt:
            continue
        if bt * seq_len > max_rows:
            break
        if batch // bt >= 2 or batch == 1:
            best = bt
    return best


def char_encoder_forward(char_ids, emb_table, conv_weights, conv_biases,
                         dilations, *, block_batch=None,
                         mxu_dtype=jnp.float32):
    """char_ids: (B, L) int; conv_weights[i]: (C_out, C_in, k) Conv1d layout.

    Returns (B, L, E + C_last).  Set mxu_dtype=jnp.bfloat16 for ~3x MXU
    throughput on the conv matmuls when ~1e-2 tolerance is acceptable.
    """
    B, L = char_ids.shape
    V, E = emb_table.shape
    kernel_size = conv_weights[0].shape[2]
    c_last = conv_weights[-1].shape[0]
    out_dim = E + c_last

    bt = block_batch if block_batch is not None else _pick_block_batch(B, L)
    assert B % bt == 0, "block_batch must divide batch"

    ids3 = char_ids.astype(jnp.int32).reshape(B, L, 1)

    # Conv weights (C_out, C_in, k) -> im2col-flattened (k*C_in, C_out) so each
    # layer is a single MXU matmul; biases as (1, C_out) rows.
    ws = [jnp.transpose(w, (2, 1, 0)).reshape(-1, w.shape[0])
          for w in conv_weights]
    bs = [b.reshape(1, -1) for b in conv_biases]

    in_specs = [
        pl.BlockSpec((bt, L, 1), lambda b: (b, 0, 0)),      # char ids
        pl.BlockSpec((V, E), lambda b: (0, 0)),             # embedding table
    ]
    layer_args = []
    for w, bias in zip(ws, bs):
        in_specs.append(pl.BlockSpec(w.shape, lambda b: (0, 0)))
        in_specs.append(pl.BlockSpec(bias.shape, lambda b: (0, 0)))
        layer_args += [w, bias]

    kernel = functools.partial(_char_encoder_kernel,
                               dilations=tuple(int(d) for d in dilations),
                               kernel_size=int(kernel_size),
                               mxu_dtype=mxu_dtype)

    return pl.pallas_call(
        kernel,
        out_shape=jax.ShapeDtypeStruct((B, L, out_dim), emb_table.dtype),
        grid_spec=pltpu.PrefetchScalarGridSpec(
            num_scalar_prefetch=0,
            grid=(B // bt,),                                # batch blocks only
            in_specs=in_specs,
            out_specs=pl.BlockSpec((bt, L, out_dim), lambda b: (b, 0, 0)),
        ),
        compiler_params=pltpu.CompilerParams(
            dimension_semantics=("parallel",),              # batch-parallel
        ),
    )(ids3, emb_table, *layer_args)


def _reference_forward(char_ids, emb_table, conv_weights, conv_biases,
                       dilations):
    """Pure-JAX reference matching the PyTorch forward (eval mode)."""
    emb = emb_table[char_ids]                               # (B, L, E)
    x = jnp.transpose(emb, (0, 2, 1))                       # (B, E, L)
    for w, b, d in zip(conv_weights, conv_biases, dilations):
        k = w.shape[2]
        p = d * (k - 1) // 2
        x = jax.lax.conv_general_dilated(
            x, w, window_strides=(1,), padding=[(p, p)],
            rhs_dilation=(d,), dimension_numbers=("NCH", "OIH", "NCH"),
            precision=jax.lax.Precision.HIGHEST)
        x = jnp.maximum(x + b[None, :, None], 0.0)
    return jnp.concatenate([emb, jnp.transpose(x, (0, 2, 1))], axis=-1)


if __name__ == "__main__":
    # Small shapes consistent with a char encoder:
    # batch=2, seq_len=16, vocab=64, char_emb=16, channels=[16, 32, 32], k=3.
    B, L = 2, 16
    V, E = 64, 16
    channels = [E, 32, 32]
    kernel_size = 3
    dilations = [2 ** i for i in range(len(channels) - 1)]  # dilated=True

    key = jax.random.PRNGKey(0)
    keys = jax.random.split(key, 2 + 2 * (len(channels) - 1))
    k_ids, k_tab = keys[0], keys[1]
    k_layers = keys[2:]

    char_ids = jax.random.randint(k_ids, (B, L), 0, V, dtype=jnp.int32)
    emb_table = jax.random.normal(k_tab, (V, E), jnp.float32)

    conv_weights, conv_biases = [], []
    for i in range(len(channels) - 1):
        c_in, c_out = channels[i], channels[i + 1]
        s = 1.0 / jnp.sqrt(c_in * kernel_size)
        conv_weights.append(jax.random.uniform(
            k_layers[2 * i], (c_out, c_in, kernel_size), jnp.float32, -s, s))
        conv_biases.append(jax.random.uniform(
            k_layers[2 * i + 1], (c_out,), jnp.float32, -s, s))

    y = char_encoder_forward(char_ids, emb_table, conv_weights, conv_biases,
                             dilations)
    y = jax.block_until_ready(y)

    y_ref = _reference_forward(char_ids, emb_table, conv_weights, conv_biases,
                               dilations)
    assert y.shape == (B, L, E + channels[-1])
    assert jnp.allclose(y, y_ref, atol=1e-4, rtol=1e-4), "mismatch vs JAX ref"

    print("KERNEL_OK")
</pallas_src>

<mosaic_0001>
module attributes {stable_mosaic.version = 11 : i64} {
  func.func @_char_encoder_kernel(%arg0: i32, %arg1: memref<1x16x1xi32, #tpu.memory_space<vmem>>, %arg2: memref<64x16xf32, #tpu.memory_space<vmem>>, %arg3: memref<48x32xf32, #tpu.memory_space<vmem>>, %arg4: memref<1x32xf32, #tpu.memory_space<vmem>>, %arg5: memref<96x32xf32, #tpu.memory_space<vmem>>, %arg6: memref<1x32xf32, #tpu.memory_space<vmem>>, %arg7: memref<1x16x48xf32, #tpu.memory_space<vmem>>) attributes {dimension_semantics = [#tpu.dimension_semantics<parallel>], iteration_bounds = array<i64: 2>, scalar_prefetch = 0 : i64, scratch_operands = 0 : i64, tpu.core_type = #tpu.core_type<tc>, window_params = [{transform_indices = @transform_0, window_bounds = array<i64: 1, 16, 1>}, {pipeline_mode = #tpu.pipeline_mode<synchronous>, transform_indices = @transform_1, window_bounds = array<i64: 64, 16>}, {pipeline_mode = #tpu.pipeline_mode<synchronous>, transform_indices = @transform_2, window_bounds = array<i64: 48, 32>}, {pipeline_mode = #tpu.pipeline_mode<synchronous>, transform_indices = @transform_3, window_bounds = array<i64: 1, 32>}, {pipeline_mode = #tpu.pipeline_mode<synchronous>, transform_indices = @transform_4, window_bounds = array<i64: 96, 32>}, {pipeline_mode = #tpu.pipeline_mode<synchronous>, transform_indices = @transform_5, window_bounds = array<i64: 1, 32>}, {transform_indices = @transform_6, window_bounds = array<i64: 1, 16, 48>}]} {
    %c0 = arith.constant 0 : index
    %c0_0 = arith.constant 0 : index
    %c0_1 = arith.constant 0 : index
    %0 = vector.load %arg1[%c0, %c0_0, %c0_1] : memref<1x16x1xi32, #tpu.memory_space<vmem>>, vector<1x16x1xi32>
    %1 = vector.shape_cast %0 : vector<1x16x1xi32> to vector<16x1xi32>
    %2 = tpu.iota {dimensions = array<i32: 1>} : vector<16x64xi32>
    %3 = vector.broadcast %1 : vector<16x1xi32> to vector<16x64xi32>
    %4 = arith.cmpi eq, %2, %3 : vector<16x64xi32>
    %5 = arith.extui %4 : vector<16x64xi1> to vector<16x64xi32>
    %6 = arith.sitofp %5 : vector<16x64xi32> to vector<16x64xf32>
    %c0_2 = arith.constant 0 : index
    %c0_3 = arith.constant 0 : index
    %7 = vector.load %arg2[%c0_2, %c0_3] : memref<64x16xf32, #tpu.memory_space<vmem>>, vector<64x16xf32>
    %cst = arith.constant dense<0.000000e+00> : vector<16x16xf32>
    %8 = tpu.matmul %6, %7, %cst {dimension_numbers = #tpu.dot_dimension_numbers<[1], [0], [0], [1], [0, 0, 1, 1], [], []>} : vector<16x64xf32>, vector<64x16xf32>, vector<16x16xf32> -> vector<16x16xf32>
    %9 = vector.shape_cast %8 : vector<16x16xf32> to vector<1x16x16xf32>
    %10 = tpu.iota {dimensions = array<i32: 1>} : vector<1x16x1xi32>
    %c1_i32 = arith.constant 1 : i32
    %11 = tpu.dynamic_rotate %9 by %c1_i32 dim 1 : vector<1x16x16xf32>, i32 -> vector<1x16x16xf32>
    %c-1_i32 = arith.constant -1 : i32
    %12 = vector.broadcast %c-1_i32 : i32 to vector<1x16x1xi32>
    %13 = arith.addi %10, %12 : vector<1x16x1xi32>
    %c0_i32 = arith.constant 0 : i32
    %14 = vector.broadcast %c0_i32 : i32 to vector<1x16x1xi32>
    %15 = arith.cmpi sge, %13, %14 : vector<1x16x1xi32>
    %c-1_i32_4 = arith.constant -1 : i32
    %16 = vector.broadcast %c-1_i32_4 : i32 to vector<1x16x1xi32>
    %17 = arith.addi %10, %16 : vector<1x16x1xi32>
    %c16_i32 = arith.constant 16 : i32
    %18 = vector.broadcast %c16_i32 : i32 to vector<1x16x1xi32>
    %19 = arith.cmpi slt, %17, %18 : vector<1x16x1xi32>
    %20 = arith.andi %15, %19 : vector<1x16x1xi1>
    %cst_5 = arith.constant 0.000000e+00 : f32
    %21 = vector.shape_cast %20 : vector<1x16x1xi1> to vector<1x16x1xi1>
    %22 = vector.broadcast %21 : vector<1x16x1xi1> to vector<1x16x16xi1>
    %23 = vector.broadcast %cst_5 : f32 to vector<1x16x16xf32>
    %24 = arith.select %22, %11, %23 : vector<1x16x16xi1>, vector<1x16x16xf32>
    %c15_i32 = arith.constant 15 : i32
    %25 = tpu.dynamic_rotate %9 by %c15_i32 dim 1 : vector<1x16x16xf32>, i32 -> vector<1x16x16xf32>
    %c1_i32_6 = arith.constant 1 : i32
    %26 = vector.broadcast %c1_i32_6 : i32 to vector<1x16x1xi32>
    %27 = arith.addi %10, %26 : vector<1x16x1xi32>
    %c0_i32_7 = arith.constant 0 : i32
    %28 = vector.broadcast %c0_i32_7 : i32 to vector<1x16x1xi32>
    %29 = arith.cmpi sge, %27, %28 : vector<1x16x1xi32>
    %c1_i32_8 = arith.constant 1 : i32
    %30 = vector.broadcast %c1_i32_8 : i32 to vector<1x16x1xi32>
    %31 = arith.addi %10, %30 : vector<1x16x1xi32>
    %c16_i32_9 = arith.constant 16 : i32
    %32 = vector.broadcast %c16_i32_9 : i32 to vector<1x16x1xi32>
    %33 = arith.cmpi slt, %31, %32 : vector<1x16x1xi32>
    %34 = arith.andi %29, %33 : vector<1x16x1xi1>
    %cst_10 = arith.constant 0.000000e+00 : f32
    %35 = vector.shape_cast %34 : vector<1x16x1xi1> to vector<1x16x1xi1>
    %36 = vector.broadcast %35 : vector<1x16x1xi1> to vector<1x16x16xi1>
    %37 = vector.broadcast %cst_10 : f32 to vector<1x16x16xf32>
    %38 = arith.select %36, %25, %37 : vector<1x16x16xi1>, vector<1x16x16xf32>
    %39 = tpu.concatenate %24, %9, %38 in 2 : vector<1x16x16xf32>, vector<1x16x16xf32>, vector<1x16x16xf32> -> vector<1x16x48xf32>
    %40 = vector.shape_cast %39 : vector<1x16x48xf32> to vector<16x48xf32>
    %c0_11 = arith.constant 0 : index
    %c0_12 = arith.constant 0 : index
    %41 = vector.load %arg3[%c0_11, %c0_12] : memref<48x32xf32, #tpu.memory_space<vmem>>, vector<48x32xf32>
    %cst_13 = arith.constant dense<0.000000e+00> : vector<16x32xf32>
    %42 = tpu.matmul %40, %41, %cst_13 {dimension_numbers = #tpu.dot_dimension_numbers<[1], [0], [0], [1], [0, 0, 1, 1], [], []>} : vector<16x48xf32>, vector<48x32xf32>, vector<16x32xf32> -> vector<16x32xf32>
    %c0_14 = arith.constant 0 : index
    %c0_15 = arith.constant 0 : index
    %43 = vector.load %arg4[%c0_14, %c0_15] : memref<1x32xf32, #tpu.memory_space<vmem>>, vector<1x32xf32>
    %44 = vector.broadcast %43 : vector<1x32xf32> to vector<16x32xf32>
    %45 = arith.addf %42, %44 : vector<16x32xf32>
    %cst_16 = arith.constant 0.000000e+00 : f32
    %46 = vector.broadcast %cst_16 : f32 to vector<16x32xf32>
    %47 = arith.maximumf %45, %46 : vector<16x32xf32>
    %48 = vector.shape_cast %47 : vector<16x32xf32> to vector<1x16x32xf32>
    %c2_i32 = arith.constant 2 : i32
    %49 = tpu.dynamic_rotate %48 by %c2_i32 dim 1 : vector<1x16x32xf32>, i32 -> vector<1x16x32xf32>
    %c-2_i32 = arith.constant -2 : i32
    %50 = vector.broadcast %c-2_i32 : i32 to vector<1x16x1xi32>
    %51 = arith.addi %10, %50 : vector<1x16x1xi32>
    %c0_i32_17 = arith.constant 0 : i32
    %52 = vector.broadcast %c0_i32_17 : i32 to vector<1x16x1xi32>
    %53 = arith.cmpi sge, %51, %52 : vector<1x16x1xi32>
    %c-2_i32_18 = arith.constant -2 : i32
    %54 = vector.broadcast %c-2_i32_18 : i32 to vector<1x16x1xi32>
    %55 = arith.addi %10, %54 : vector<1x16x1xi32>
    %c16_i32_19 = arith.constant 16 : i32
    %56 = vector.broadcast %c16_i32_19 : i32 to vector<1x16x1xi32>
    %57 = arith.cmpi slt, %55, %56 : vector<1x16x1xi32>
    %58 = arith.andi %53, %57 : vector<1x16x1xi1>
    %cst_20 = arith.constant 0.000000e+00 : f32
    %59 = vector.shape_cast %58 : vector<1x16x1xi1> to vector<1x16x1xi1>
    %60 = vector.broadcast %59 : vector<1x16x1xi1> to vector<1x16x32xi1>
    %61 = vector.broadcast %cst_20 : f32 to vector<1x16x32xf32>
    %62 = arith.select %60, %49, %61 : vector<1x16x32xi1>, vector<1x16x32xf32>
    %c14_i32 = arith.constant 14 : i32
    %63 = tpu.dynamic_rotate %48 by %c14_i32 dim 1 : vector<1x16x32xf32>, i32 -> vector<1x16x32xf32>
    %c2_i32_21 = arith.constant 2 : i32
    %64 = vector.broadcast %c2_i32_21 : i32 to vector<1x16x1xi32>
    %65 = arith.addi %10, %64 : vector<1x16x1xi32>
    %c0_i32_22 = arith.constant 0 : i32
    %66 = vector.broadcast %c0_i32_22 : i32 to vector<1x16x1xi32>
    %67 = arith.cmpi sge, %65, %66 : vector<1x16x1xi32>
    %c2_i32_23 = arith.constant 2 : i32
    %68 = vector.broadcast %c2_i32_23 : i32 to vector<1x16x1xi32>
    %69 = arith.addi %10, %68 : vector<1x16x1xi32>
    %c16_i32_24 = arith.constant 16 : i32
    %70 = vector.broadcast %c16_i32_24 : i32 to vector<1x16x1xi32>
    %71 = arith.cmpi slt, %69, %70 : vector<1x16x1xi32>
    %72 = arith.andi %67, %71 : vector<1x16x1xi1>
    %cst_25 = arith.constant 0.000000e+00 : f32
    %73 = vector.shape_cast %72 : vector<1x16x1xi1> to vector<1x16x1xi1>
    %74 = vector.broadcast %73 : vector<1x16x1xi1> to vector<1x16x32xi1>
    %75 = vector.broadcast %cst_25 : f32 to vector<1x16x32xf32>
    %76 = arith.select %74, %63, %75 : vector<1x16x32xi1>, vector<1x16x32xf32>
    %77 = tpu.concatenate %62, %48, %76 in 2 : vector<1x16x32xf32>, vector<1x16x32xf32>, vector<1x16x32xf32> -> vector<1x16x96xf32>
    %78 = vector.shape_cast %77 : vector<1x16x96xf32> to vector<16x96xf32>
    %c0_26 = arith.constant 0 : index
    %c0_27 = arith.constant 0 : index
    %79 = vector.load %arg5[%c0_26, %c0_27] : memref<96x32xf32, #tpu.memory_space<vmem>>, vector<96x32xf32>
    %cst_28 = arith.constant dense<0.000000e+00> : vector<16x32xf32>
    %80 = tpu.matmul %78, %79, %cst_28 {dimension_numbers = #tpu.dot_dimension_numbers<[1], [0], [0], [1], [0, 0, 1, 1], [], []>} : vector<16x96xf32>, vector<96x32xf32>, vector<16x32xf32> -> vector<16x32xf32>
    %c0_29 = arith.constant 0 : index
    %c0_30 = arith.constant 0 : index
    %81 = vector.load %arg6[%c0_29, %c0_30] : memref<1x32xf32, #tpu.memory_space<vmem>>, vector<1x32xf32>
    %82 = vector.broadcast %81 : vector<1x32xf32> to vector<16x32xf32>
    %83 = arith.addf %80, %82 : vector<16x32xf32>
    %cst_31 = arith.constant 0.000000e+00 : f32
    %84 = vector.broadcast %cst_31 : f32 to vector<16x32xf32>
    %85 = arith.maximumf %83, %84 : vector<16x32xf32>
    %86 = vector.shape_cast %85 : vector<16x32xf32> to vector<1x16x32xf32>
    %87 = tpu.concatenate %9, %86 in 2 : vector<1x16x16xf32>, vector<1x16x32xf32> -> vector<1x16x48xf32>
    %c0_32 = arith.constant 0 : index
    %c0_33 = arith.constant 0 : index
    %c0_34 = arith.constant 0 : index
    %88 = vector.load %arg7[%c0_32, %c0_33, %c0_34] : memref<1x16x48xf32, #tpu.memory_space<vmem>>, vector<1x16x48xf32>
    tpu.vector_store %arg7[%c0_32, %c0_33, %c0_34], %87 {strides = array<i32>} : memref<1x16x48xf32, #tpu.memory_space<vmem>>, vector<1x16x48xf32>,
    return
  }
  func.func @transform_0(%arg0: i32) -> (i32, i32, i32) {
    %c0_i32 = arith.constant 0 : i32
    %c0_i32_0 = arith.constant 0 : i32
    %c0_i32_1 = arith.constant 0 : i32
    return %arg0, %c0_i32, %c0_i32_0 : i32, i32, i32
  }
  func.func @transform_1(%arg0: i32) -> (i32, i32) {
    %c0_i32 = arith.constant 0 : i32
    %c0_i32_0 = arith.constant 0 : i32
    %c0_i32_1 = arith.constant 0 : i32
    return %c0_i32, %c0_i32_0 : i32, i32
  }
  func.func @transform_2(%arg0: i32) -> (i32, i32) {
    %c0_i32 = arith.constant 0 : i32
    %c0_i32_0 = arith.constant 0 : i32
    %c0_i32_1 = arith.constant 0 : i32
    return %c0_i32, %c0_i32_0 : i32, i32
  }
  func.func @transform_3(%arg0: i32) -> (i32, i32) {
    %c0_i32 = arith.constant 0 : i32
    %c0_i32_0 = arith.constant 0 : i32
    %c0_i32_1 = arith.constant 0 : i32
    return %c0_i32, %c0_i32_0 : i32, i32
  }
  func.func @transform_4(%arg0: i32) -> (i32, i32) {
    %c0_i32 = arith.constant 0 : i32
    %c0_i32_0 = arith.constant 0 : i32
    %c0_i32_1 = arith.constant 0 : i32
    return %c0_i32, %c0_i32_0 : i32, i32
  }
  func.func @transform_5(%arg0: i32) -> (i32, i32) {
    %c0_i32 = arith.constant 0 : i32
    %c0_i32_0 = arith.constant 0 : i32
    %c0_i32_1 = arith.constant 0 : i32
    return %c0_i32, %c0_i32_0 : i32, i32
  }
  func.func @transform_6(%arg0: i32) -> (i32, i32, i32) {
    %c0_i32 = arith.constant 0 : i32
    %c0_i32_0 = arith.constant 0 : i32
    %c0_i32_1 = arith.constant 0 : i32
    return %arg0, %c0_i32, %c0_i32_0 : i32, i32, i32
  }
}

</mosaic_0001>

<llo_original>
// kernel: tpu_custom_call.1
$region0: #{tpu_custom_call.1}
  #allocation0 [shape = 'u32[]', space=smem, size = 0x4, offset = 0x4, fixed_abs, tag = 'smem constant byte address 0x4 - core index']
  #allocation1 [shape = 'u32[72,128]{1,0:T(1,128)}', space=vmem, size = 0x9000, scoped, tag = 'internal scratch']
  %s0 = inlined_call_operand.vmem [shape: s32[2,16,1], index: 0, kind: input, shape index: {}]
  %s1 = inlined_call_operand.vmem [shape: f32[64,16], index: 1, kind: input, shape index: {}]
  %s2 = inlined_call_operand.vmem [shape: f32[48,32], index: 2, kind: input, shape index: {}]
  %s3 = inlined_call_operand.vmem [shape: f32[1,32], index: 3, kind: input, shape index: {}]
  %s4 = inlined_call_operand.vmem [shape: f32[96,32], index: 4, kind: input, shape index: {}]
  %s5 = inlined_call_operand.vmem [shape: f32[1,32], index: 5, kind: input, shape index: {}]
  %s6 = inlined_call_operand.hbm [shape: f32[2,16,48], index: 6, kind: output, shape index: {}]
  %s7 = sld [smem:[#allocation0]]
  $region57: #{tpu_custom_call.1} parent=0
    _
  %s9 = ssub.s32 1, %s7
  %s10 = scalar_select 0, %s9, %s7
  $region1: #{tpu_custom_call.1} parent=0
    #allocation2 [shape = 'u8[16384]{0}', space=vmem, size = 0x4000, scoped, tag = 'output window, operand 0']
    #allocation3 [shape = 's32[2]{0}', space=sflag, size = 0x8, scoped, tag = 'scoped memory for tpu_custom_call.1']
    %11 = vsyncpa [#allocation3], 0
    %s12 = scalar_lea.sflag [#allocation3], 1
    %13 = vsyncpa %s12, 0
    loop: start=0, step=1, limit=4
    $region2: #{tpu_custom_call.1} parent=1 // loop_pre_header
      _
    $region3: #{tpu_custom_call.1} parent=1 // loop_header
      %s15 = sphi 0, %s19
      %p16 = scmp.ge.s32.totalorder %s15, 4
      %s25 = sphi 0, %s27
      %s28 = sphi 0, %s25
      %s29 = sphi 0, %s28
      %s45 = sphi 0, %s29
      %s49 = sphi 0, %s49
      %s51 = sphi 0, %s49
      %s52 = sphi 0, %s51
      %s66 = sphi 0, %s52
      %s70 = sphi 0, %s70
      %s72 = sphi 0, %s70
      %s73 = sphi 0, %s72
      %s87 = sphi 0, %s73
      %s91 = sphi 0, %s91
      %s93 = sphi 0, %s91
      %s94 = sphi 0, %s93
      %s108 = sphi 0, %s94
      %s112 = sphi 0, %s112
      %s114 = sphi 0, %s112
      %s115 = sphi 0, %s114
      %s129 = sphi 0, %s115
      %s133 = sphi 0, %s133
      %s135 = sphi 0, %s133
      %s136 = sphi 0, %s135
      %s150 = sphi 0, %s136
      %s156 = sphi 0, %s158
      %s159 = sphi 0, %s156
      %s160 = sphi 0, %s159
      %s176 = sphi 0, %s160
    $region4: #{tpu_custom_call.1} parent=1 // loop_header_branch
      %18 = sbr.rel (%p16) target = $region8
    $region5: #{tpu_custom_call.1} parent=1 // loop_body
      %s20 = ssub.s32 %s15, 1
      %s21 = ssub.s32 %s15, 2
      %s22 = sadd.s32 %s15, 1
      %s23 = ssub.s32 %s15, %s22
      %p24 = scmp.eq.s32.totalorder %s23, 0
      %s26 = sadd.s32 %s25, 1
      %s27 = scalar_select %p24, %s25, %s26
      %p30 = pneg %p24
      %p31 = scmp.eq.s32.totalorder %s15, 1
      %p32 = por %p30, %p31
      %p33 = scmp.ne.s32.totalorder %s25, %s28
      %p34 = scmp.eq.s32.totalorder %s15, 0
      %p35 = por %p33, %p34
      %p36 = scmp.ne.s32.totalorder %s25, %s28
      %p37 = scmp.eq.s32.totalorder %s20, 1
      %p38 = por %p36, %p37
      %p39 = scmp.ne.s32.totalorder %s28, %s29
      %p40 = scmp.eq.s32.totalorder %s20, 0
      %p41 = por %p39, %p40
      %p42 = scmp.ne.s32.totalorder %s28, %s29
      %p43 = scmp.eq.s32.totalorder %s21, 1
      %p44 = por %p42, %p43
      %p46 = scmp.ne.s32.totalorder %s29, %s45
      %p47 = scmp.eq.s32.totalorder %s21, 0
      %p48 = por %p46, %p47
      %s50 = sadd.s32 %s49, 1
      %p53 = scmp.eq.s32.totalorder %s15, 1
      %p54 = scmp.ne.s32.totalorder %s49, %s51
      %p55 = scmp.eq.s32.totalorder %s15, 0
      %p56 = por %p54, %p55
      %p57 = scmp.ne.s32.totalorder %s49, %s51
      %p58 = scmp.eq.s32.totalorder %s20, 1
      %p59 = por %p57, %p58
      %p60 = scmp.ne.s32.totalorder %s51, %s52
      %p61 = scmp.eq.s32.totalorder %s20, 0
      %p62 = por %p60, %p61
      %p63 = scmp.ne.s32.totalorder %s51, %s52
      %p64 = scmp.eq.s32.totalorder %s21, 1
      %p65 = por %p63, %p64
      %p67 = scmp.ne.s32.totalorder %s52, %s66
      %p68 = scmp.eq.s32.totalorder %s21, 0
      %p69 = por %p67, %p68
      %s71 = sadd.s32 %s70, 1
      %p74 = scmp.eq.s32.totalorder %s15, 1
      %p75 = scmp.ne.s32.totalorder %s70, %s72
      %p76 = scmp.eq.s32.totalorder %s15, 0
      %p77 = por %p75, %p76
      %p78 = scmp.ne.s32.totalorder %s70, %s72
      %p79 = scmp.eq.s32.totalorder %s20, 1
      %p80 = por %p78, %p79
      %p81 = scmp.ne.s32.totalorder %s72, %s73
      %p82 = scmp.eq.s32.totalorder %s20, 0
      %p83 = por %p81, %p82
      %p84 = scmp.ne.s32.totalorder %s72, %s73
      %p85 = scmp.eq.s32.totalorder %s21, 1
      %p86 = por %p84, %p85
      %p88 = scmp.ne.s32.totalorder %s73, %s87
      %p89 = scmp.eq.s32.totalorder %s21, 0
      %p90 = por %p88, %p89
      %s92 = sadd.s32 %s91, 1
      %p95 = scmp.eq.s32.totalorder %s15, 1
      %p96 = scmp.ne.s32.totalorder %s91, %s93
      %p97 = scmp.eq.s32.totalorder %s15, 0
      %p98 = por %p96, %p97
      %p99 = scmp.ne.s32.totalorder %s91, %s93
      %p100 = scmp.eq.s32.totalorder %s20, 1
      %p101 = por %p99, %p100
      %p102 = scmp.ne.s32.totalorder %s93, %s94
      %p103 = scmp.eq.s32.totalorder %s20, 0
      %p104 = por %p102, %p103
      %p105 = scmp.ne.s32.totalorder %s93, %s94
      %p106 = scmp.eq.s32.totalorder %s21, 1
      %p107 = por %p105, %p106
      %p109 = scmp.ne.s32.totalorder %s94, %s108
      %p110 = scmp.eq.s32.totalorder %s21, 0
      %p111 = por %p109, %p110
      %s113 = sadd.s32 %s112, 1
      %p116 = scmp.eq.s32.totalorder %s15, 1
      %p117 = scmp.ne.s32.totalorder %s112, %s114
      %p118 = scmp.eq.s32.totalorder %s15, 0
      %p119 = por %p117, %p118
      %p120 = scmp.ne.s32.totalorder %s112, %s114
      %p121 = scmp.eq.s32.totalorder %s20, 1
      %p122 = por %p120, %p121
      %p123 = scmp.ne.s32.totalorder %s114, %s115
      %p124 = scmp.eq.s32.totalorder %s20, 0
      %p125 = por %p123, %p124
      %p126 = scmp.ne.s32.totalorder %s114, %s115
      %p127 = scmp.eq.s32.totalorder %s21, 1
      %p128 = por %p126, %p127
      %p130 = scmp.ne.s32.totalorder %s115, %s129
      %p131 = scmp.eq.s32.totalorder %s21, 0
      %p132 = por %p130, %p131
      %s134 = sadd.s32 %s133, 1
      %p137 = scmp.eq.s32.totalorder %s15, 1
      %p138 = scmp.ne.s32.totalorder %s133, %s135
      %p139 = scmp.eq.s32.totalorder %s15, 0
      %p140 = por %p138, %p139
      %p141 = scmp.ne.s32.totalorder %s133, %s135
      %p142 = scmp.eq.s32.totalorder %s20, 1
      %p143 = por %p141, %p142
      %p144 = scmp.ne.s32.totalorder %s135, %s136
      %p145 = scmp.eq.s32.totalorder %s20, 0
      %p146 = por %p144, %p145
      %p147 = scmp.ne.s32.totalorder %s135, %s136
      %p148 = scmp.eq.s32.totalorder %s21, 1
      %p149 = por %p147, %p148
      %p151 = scmp.ne.s32.totalorder %s136, %s150
      %p152 = scmp.eq.s32.totalorder %s21, 0
      %p153 = por %p151, %p152
      %s154 = ssub.s32 %s15, %s22
      %p155 = scmp.eq.s32.totalorder %s154, 0
      %s157 = sadd.s32 %s156, 1
      %s158 = scalar_select %p155, %s156, %s157
      %p161 = pneg %p155
      %p162 = scmp.eq.s32.totalorder %s15, 1
      %p163 = por %p161, %p162
      %p164 = scmp.ne.s32.totalorder %s156, %s159
      %p165 = scmp.eq.s32.totalorder %s15, 0
      %p166 = por %p164, %p165
      %p167 = scmp.ne.s32.totalorder %s156, %s159
      %p168 = scmp.eq.s32.totalorder %s20, 1
      %p169 = por %p167, %p168
      %p170 = scmp.ne.s32.totalorder %s159, %s160
      %p171 = scmp.eq.s32.totalorder %s20, 0
      %p172 = por %p170, %p171
      %p173 = scmp.ne.s32.totalorder %s159, %s160
      %p174 = scmp.eq.s32.totalorder %s21, 1
      %p175 = por %p173, %p174
      %p177 = scmp.ne.s32.totalorder %s160, %s176
      %p178 = scmp.eq.s32.totalorder %s21, 0
      %p179 = por %p177, %p178
      %p180 = scmp.le.s32.totalorder 1, %s15
      %p181 = scmp.lt.s32.totalorder %s15, 3
      %p182 = pnand %p180, %p181
      %p183 = pneg %p182
      // Predicated region
      $region9: #{tpu_custom_call.1} parent=5 // pred_check
        _
      $region10: #{tpu_custom_call.1} parent=5 // pred_check_branch
        %185 = sbr.rel (%p182) target = $region12
      $region11: #{tpu_custom_call.1} parent=5 // pred_region
        %s186 = ssub.s32 %s15, 1
        // Predicated region
        $region13: #{tpu_custom_call.1} parent=11 // pred_check
          %p187 = pneg %p62
        $region14: #{tpu_custom_call.1} parent=11 // pred_check_branch
          %189 = sbr.rel (%p187) target = $region16
        $region15: #{tpu_custom_call.1} parent=11 // pred_region
          _
        $region16: #{tpu_custom_call.1} parent=11 // pred_fallthru
          _
        // Predicated region
        $region17: #{tpu_custom_call.1} parent=11 // pred_check
          %p190 = pneg %p83
        $region18: #{tpu_custom_call.1} parent=11 // pred_check_branch
          %192 = sbr.rel (%p190) target = $region20
        $region19: #{tpu_custom_call.1} parent=11 // pred_region
          _
        $region20: #{tpu_custom_call.1} parent=11 // pred_fallthru
          _
        // Predicated region
        $region21: #{tpu_custom_call.1} parent=11 // pred_check
          %p193 = pneg %p104
        $region22: #{tpu_custom_call.1} parent=11 // pred_check_branch
          %195 = sbr.rel (%p193) target = $region24
        $region23: #{tpu_custom_call.1} parent=11 // pred_region
          _
        $region24: #{tpu_custom_call.1} parent=11 // pred_fallthru
          _
        // Predicated region
        $region25: #{tpu_custom_call.1} parent=11 // pred_check
          %p196 = pneg %p125
        $region26: #{tpu_custom_call.1} parent=11 // pred_check_branch
          %198 = sbr.rel (%p196) target = $region28
        $region27: #{tpu_custom_call.1} parent=11 // pred_region
          _
        $region28: #{tpu_custom_call.1} parent=11 // pred_fallthru
          _
        // Predicated region
        $region29: #{tpu_custom_call.1} parent=11 // pred_check
          %p199 = pneg %p146
        $region30: #{tpu_custom_call.1} parent=11 // pred_check_branch
          %201 = sbr.rel (%p199) target = $region32
        $region31: #{tpu_custom_call.1} parent=11 // pred_region
          _
        $region32: #{tpu_custom_call.1} parent=11 // pred_fallthru
          _
      $region12: #{tpu_custom_call.1} parent=5 // pred_fallthru
        _
      %p202 = scmp.lt.s32.totalorder %s15, 2
      // Predicated region
      $region33: #{tpu_custom_call.1} parent=5 // pred_check
        %p203 = pneg %p202
      $region34: #{tpu_custom_call.1} parent=5 // pred_check_branch
        %205 = sbr.rel (%p203) target = $region36
      $region35: #{tpu_custom_call.1} parent=5 // pred_region
        // Predicated region
        $region37: #{tpu_custom_call.1} parent=35 // pred_check
          %p206 = pneg %p35
        $region38: #{tpu_custom_call.1} parent=35 // pred_check_branch
          %208 = sbr.rel (%p206) target = $region40
        $region39: #{tpu_custom_call.1} parent=35 // pred_region
          %p209 = scmp.lt.s32.totalorder %s15, 1
          %s210 = scalar_select %p209, %s15, 1
          %s211 = smul.addr %s210, 2
          %s212 = smul.addr %s211, 8
          %s213 = scalar_lea.vmem %s0, %s212
        $region40: #{tpu_custom_call.1} parent=35 // pred_fallthru
          _
      $region36: #{tpu_custom_call.1} parent=5 // pred_fallthru
        _
      %p214 = scmp.le.s32.totalorder 1, %s15
      %p215 = scmp.lt.s32.totalorder %s15, 3
      %p216 = pnand %p214, %p215
      %p217 = pneg %p216
      // Predicated region
      $region41: #{tpu_custom_call.1} parent=5 // pred_check
        _
      $region42: #{tpu_custom_call.1} parent=5 // pred_check_branch
        %219 = sbr.rel (%p216) target = $region44
      $region43: #{tpu_custom_call.1} parent=5 // pred_region
        %s220 = ssub.s32 %s15, 1
        %p221 = scmp.lt.s32.totalorder %s20, 1
        %s222 = scalar_select %p221, %s20, 1
        %s223 = smul.addr %s222, 2
        %s224 = smul.addr %s223, 8
        %s225 = scalar_lea.vmem %s0, %s224
        %p226 = pneg %p41
        %p227 = pneg %p38
        %p228 = pneg %p62
        %p229 = pneg %p59
        %p230 = pneg %p83
        %p231 = pneg %p80
        %p232 = pneg %p104
        %p233 = pneg %p101
        %p234 = pneg %p125
        %p235 = pneg %p122
        %p236 = pneg %p146
        %p237 = pneg %p143
        %p238 = pneg %p172
        %p239 = pneg %p169
        %s240 = sand.u32 %s159, 1
        %s241 = scalar_lea.sflag [#allocation3], %s240
        %s242 = sand.u32 %s159, 1
        %s243 = smul.addr %s242, 16
        %s244 = scalar_lea.vmem [#allocation2], %s243
        %p245 = scmp.lt.s32.totalorder %s20, 1
        %s246 = scalar_select %p245, %s20, 1
        %s247 = smul.addr %s246, 2
        %s248 = smul.addr %s247, 8
        %s249 = scalar_lea.vmem %s0, %s248
        %v250 = vld [vmem:[%s249] sm:$0xff]
        %v251 = vld [vmem:[%s249 + $0x8] sm:$0xff]
        %v252 = vlaneseq
        %v253 = vand.u32 %v252, 127
        %254 = vset.pattern.permute.xlu0 0
        %255 = vperm.xlu0 %254, %v250
        %v256 = vpop.permute.xlu0 %255
        %257 = vset.pattern.permute.xlu0 0
        %258 = vperm.xlu0 %257, %v251
        %v259 = vpop.permute.xlu0 %258
        %vm260 = vcmp.eq.s32.totalorder %v253, %v256
        %vm261 = vcmp.eq.s32.totalorder %v253, %v259
        %v262 = vsel %vm260, 1, 0
        %v263 = vsel %vm261, 1, 0
        %v264 = vcvt.s32.f32 %v262
        %v265 = vcvt.s32.f32 %v263
        %v266 = vld [vmem:[%s1] sm:$0xff]
        %v267 = vld [vmem:[%s1 + $0x8] sm:$0xff]
        %v268 = vld [vmem:[%s1 + $0x10] sm:$0xff]
        %v269 = vld [vmem:[%s1 + $0x18] sm:$0xff]
        %v270 = vld [vmem:[%s1 + $0x20] sm:$0xff]
        %v271 = vld [vmem:[%s1 + $0x28] sm:$0xff]
        %v272 = vld [vmem:[%s1 + $0x30] sm:$0xff]
        %v273 = vld [vmem:[%s1 + $0x38] sm:$0xff]
        %vm274 = vcmask 523264
        %v276 = vsel %vm274, %v264, 0
        %v279 = vsel %vm274, %v265, 0
        %281 = vmatpush.msra.mxu0 0.0
        %282 = vmatpush.msra.mxu0 0.0
        %283 = vmatpush.msra.mxu0 0.0
        %284 = vmatpush.msra.mxu0 0.0
        %285 = vmatpush.msra.mxu0 0.0
        %286 = vmatpush.msra.mxu0 0.0
        %287 = vmatpush.msra.mxu0 0.0
        %288 = vmatpush.msra.mxu0 0.0
        %289 = vmatpush.msra.mxu0 %v273
        %290 = vmatpush.msra.mxu0 %v272
        %291 = vmatpush.msra.mxu0 %v271
        %292 = vmatpush.msra.mxu0 %v270
        %293 = vmatpush.msra.mxu0 %v269
        %294 = vmatpush.msra.mxu0 %v268
        %295 = vmatpush.msra.mxu0 %v267
        %296 = vmatpush.msra.mxu0 %v266
        %297 = vmatmul.f32.gmra.mxu0 %v276
        %v298 = vpop.f32.mrf.mxu0
        %v299 = vadd.f32 0.0, %v298
        %300 = vmatmul.f32.gmra.mxu0 %v279
        %v301 = vpop.f32.mrf.mxu0
        %v302 = vadd.f32 0.0, %v301
        %303 = vdwg.mxu0
        %v304 = vlaneseq
        %v305 = vshrl.u32 %v304, 7
        %v306 = vadd.s32 %v305, 8
        %v307 = vrot.slane %v299, 7
        %v308 = vrot.slane %v302, 7
        %vm309 = vcmp.lt.s32.totalorder %v305, 1
        %v310 = vsel %vm309, %v307, %v308
        %v311 = vsel %vm309, %v308, %v307
        %v312 = vadd.s32 %v305, 4294967295
        %v313 = vadd.s32 %v306, 4294967295
        %vm314 = vcmp.ge.s32.totalorder %v312, 0
        %vm315 = vcmp.ge.s32.totalorder %v313, 0
        %vm316 = vcmp.lt.s32.totalorder %v312, 16
        %vm317 = vcmp.lt.s32.totalorder %v313, 16
        %vm318 = vmand %vm314, %vm316
        %vm319 = vmand %vm315, %vm317
        %v320 = vsel %vm318, 1, 0
        %v321 = vsel %vm319, 1, 0
        %vm322 = vcmp.eq.s32.totalorder %v320, 1
        %vm323 = vcmp.eq.s32.totalorder %v321, 1
        %v324 = vsel %vm322, %v311, 0.0
        %v325 = vsel %vm323, %v310, 0.0
        %v326 = vrot.slane %v299, 1
        %v327 = vrot.slane %v302, 1
        %vm328 = vcmp.lt.s32.totalorder %v305, 7
        %v329 = vsel %vm328, %v326, %v327
        %v330 = vsel %vm328, %v327, %v326
        %v331 = vadd.s32 %v305, 1
        %v332 = vadd.s32 %v306, 1
        %vm333 = vcmp.ge.s32.totalorder %v331, 0
        %vm334 = vcmp.ge.s32.totalorder %v332, 0
        %vm335 = vcmp.lt.s32.totalorder %v331, 16
        %vm336 = vcmp.lt.s32.totalorder %v332, 16
        %vm337 = vmand %vm333, %vm335
        %vm338 = vmand %vm334, %vm336
        %v339 = vsel %vm337, 1, 0
        %v340 = vsel %vm338, 1, 0
        %vm341 = vcmp.eq.s32.totalorder %v339, 1
        %vm342 = vcmp.eq.s32.totalorder %v340, 1
        %v343 = vsel %vm341, %v329, 0.0
        %v344 = vsel %vm342, %v330, 0.0
        %347 = vrot.lane.b32.xlu0 %v299, 16
        %v348 = vpop.permute.xlu0 %347
        %349 = vrot.lane.b32.xlu0 %v302, 16
        %v350 = vpop.permute.xlu0 %349
        %355 = vrot.lane.b32.xlu0 %v343, 32
        %v356 = vpop.permute.xlu0 %355
        %357 = vrot.lane.b32.xlu0 %v344, 32
        %v358 = vpop.permute.xlu0 %357
        %vm361 = vcmask 130048
        %v362 = vsel %vm361, %v324, %v348
        %v363 = vsel %vm361, %v325, %v350
        %vm364 = vcmask 261120
        %v365 = vsel %vm364, %v362, %v356
        %v366 = vsel %vm364, %v363, %v358
        %v367 = vld [vmem:[%s2] sm:$0xff]
        %v368 = vld [vmem:[%s2 + $0x8] sm:$0xff]
        %v369 = vld [vmem:[%s2 + $0x10] sm:$0xff]
        %v370 = vld [vmem:[%s2 + $0x18] sm:$0xff]
        %v371 = vld [vmem:[%s2 + $0x20] sm:$0xff]
        %v372 = vld [vmem:[%s2 + $0x28] sm:$0xff]
        %v373 = vld [vmem:[%s3] sm:$0x1]
        %v375 = vperm.slane %v373, 0
        %vm377 = vcmask 392192
        %v379 = vsel %vm377, %v365, 0
        %v382 = vsel %vm377, %v366, 0
        %384 = vmatpush.msra.mxu0 0.0
        %385 = vmatpush.msra.mxu0 0.0
        %386 = vmatpush.msra.mxu0 0.0
        %387 = vmatpush.msra.mxu0 0.0
        %388 = vmatpush.msra.mxu0 0.0
        %389 = vmatpush.msra.mxu0 0.0
        %390 = vmatpush.msra.mxu0 0.0
        %391 = vmatpush.msra.mxu0 0.0
        %392 = vmatpush.msra.mxu0 0.0
        %393 = vmatpush.msra.mxu0 0.0
        %394 = vmatpush.msra.mxu0 %v372
        %395 = vmatpush.msra.mxu0 %v371
        %396 = vmatpush.msra.mxu0 %v370
        %397 = vmatpush.msra.mxu0 %v369
        %398 = vmatpush.msra.mxu0 %v368
        %399 = vmatpush.msra.mxu0 %v367
        %400 = vmatmul.f32.gmra.mxu0 %v379
        %v401 = vpop.f32.mrf.mxu0
        %v402 = vadd.f32 %v375, %v401
        %403 = vmatmul.f32.gmra.mxu0 %v382
        %v404 = vpop.f32.mrf.mxu0
        %v405 = vadd.f32 %v375, %v404
        %406 = vdwg.mxu0
        %v407 = vmax.f32 %v402, 0.0
        %v408 = vmax.f32 %v405, 0.0
        %v409 = vrot.slane %v407, 6
        %v410 = vrot.slane %v408, 6
        %vm411 = vcmp.lt.s32.totalorder %v305, 2
        %v412 = vsel %vm411, %v409, %v410
        %v413 = vsel %vm411, %v410, %v409
        %v414 = vadd.s32 %v305, 4294967294
        %v415 = vadd.s32 %v306, 4294967294
        %vm416 = vcmp.ge.s32.totalorder %v414, 0
        %vm417 = vcmp.ge.s32.totalorder %v415, 0
        %vm418 = vcmp.lt.s32.totalorder %v414, 16
        %vm419 = vcmp.lt.s32.totalorder %v415, 16
        %vm420 = vmand %vm416, %vm418
        %vm421 = vmand %vm417, %vm419
        %v422 = vsel %vm420, 1, 0
        %v423 = vsel %vm421, 1, 0
        %vm424 = vcmp.eq.s32.totalorder %v422, 1
        %vm425 = vcmp.eq.s32.totalorder %v423, 1
        %v426 = vsel %vm424, %v413, 0.0
        %v427 = vsel %vm425, %v412, 0.0
        %v428 = vrot.slane %v407, 2
        %v429 = vrot.slane %v408, 2
        %vm430 = vcmp.lt.s32.totalorder %v305, 6
        %v431 = vsel %vm430, %v428, %v429
        %v432 = vsel %vm430, %v429, %v428
        %v433 = vadd.s32 %v305, 2
        %v434 = vadd.s32 %v306, 2
        %vm435 = vcmp.ge.s32.totalorder %v433, 0
        %vm436 = vcmp.ge.s32.totalorder %v434, 0
        %vm437 = vcmp.lt.s32.totalorder %v433, 16
        %vm438 = vcmp.lt.s32.totalorder %v434, 16
        %vm439 = vmand %vm435, %vm437
        %vm440 = vmand %vm436, %vm438
        %v441 = vsel %vm439, 1, 0
        %v442 = vsel %vm440, 1, 0
        %vm443 = vcmp.eq.s32.totalorder %v441, 1
        %vm444 = vcmp.eq.s32.totalorder %v442, 1
        %v445 = vsel %vm443, %v431, 0.0
        %v446 = vsel %vm444, %v432, 0.0
        %449 = vrot.lane.b32.xlu0 %v407, 32
        %v450 = vpop.permute.xlu0 %449
        %451 = vrot.lane.b32.xlu0 %v408, 32
        %v452 = vpop.permute.xlu0 %451
        %457 = vrot.lane.b32.xlu0 %v445, 64
        %v458 = vpop.permute.xlu0 %457
        %459 = vrot.lane.b32.xlu0 %v446, 64
        %v460 = vpop.permute.xlu0 %459
        %v463 = vsel %vm364, %v426, %v450
        %v464 = vsel %vm364, %v427, %v452
        %v465 = vsel %vm274, %v463, %v458
        %v466 = vsel %vm274, %v464, %v460
        %v467 = vld [vmem:[%s4] sm:$0xff]
        %v468 = vld [vmem:[%s4 + $0x8] sm:$0xff]
        %v469 = vld [vmem:[%s4 + $0x10] sm:$0xff]
        %v470 = vld [vmem:[%s4 + $0x18] sm:$0xff]
        %v471 = vld [vmem:[%s4 + $0x20] sm:$0xff]
        %v472 = vld [vmem:[%s4 + $0x28] sm:$0xff]
        %v473 = vld [vmem:[%s4 + $0x30] sm:$0xff]
        %v474 = vld [vmem:[%s4 + $0x38] sm:$0xff]
        %v475 = vld [vmem:[%s4 + $0x40] sm:$0xff]
        %v476 = vld [vmem:[%s4 + $0x48] sm:$0xff]
        %v477 = vld [vmem:[%s4 + $0x50] sm:$0xff]
        %v478 = vld [vmem:[%s4 + $0x58] sm:$0xff]
        %v479 = vld [vmem:[%s5] sm:$0x1]
        %v481 = vperm.slane %v479, 0
        %vm483 = vcmask 785408
        %v485 = vsel %vm483, %v465, 0
        %v488 = vsel %vm483, %v466, 0
        %490 = vmatpush.msra.mxu0 0.0
        %491 = vmatpush.msra.mxu0 0.0
        %492 = vmatpush.msra.mxu0 0.0
        %493 = vmatpush.msra.mxu0 0.0
        %494 = vmatpush.msra.mxu0 %v478
        %495 = vmatpush.msra.mxu0 %v477
        %496 = vmatpush.msra.mxu0 %v476
        %497 = vmatpush.msra.mxu0 %v475
        %498 = vmatpush.msra.mxu0 %v474
        %499 = vmatpush.msra.mxu0 %v473
        %500 = vmatpush.msra.mxu0 %v472
        %501 = vmatpush.msra.mxu0 %v471
        %502 = vmatpush.msra.mxu0 %v470
        %503 = vmatpush.msra.mxu0 %v469
        %504 = vmatpush.msra.mxu0 %v468
        %505 = vmatpush.msra.mxu0 %v467
        %506 = vmatmul.f32.gmra.mxu0 %v485
        %v507 = vpop.f32.mrf.mxu0
        %v508 = vadd.f32 %v481, %v507
        %509 = vmatmul.f32.gmra.mxu0 %v488
        %v510 = vpop.f32.mrf.mxu0
        %v511 = vadd.f32 %v481, %v510
        %512 = vdwg.mxu0
        %v513 = vmax.f32 %v508, 0.0
        %v514 = vmax.f32 %v511, 0.0
        %517 = vrot.lane.b32.xlu0 %v513, 16
        %v518 = vpop.permute.xlu0 %517
        %519 = vrot.lane.b32.xlu0 %v514, 16
        %v520 = vpop.permute.xlu0 %519
        %v523 = vsel %vm361, %v299, %v518
        %v524 = vsel %vm361, %v302, %v520
        %525 = vst.msk [vmem:[%s244] sm:$0xff] %vm377, %v523
        %526 = vst.msk [vmem:[%s244 + $0x8] sm:$0xff] %vm377, %v524
        %s527 = sand.u32 %s159, 1
        %s528 = scalar_lea.sflag [#allocation3], %s527
        %s529 = sand.u32 %s159, 1
        %s530 = smul.addr %s529, 16
        %s531 = scalar_lea.vmem [#allocation2], %s530
        // Predicated region
        $region45: #{tpu_custom_call.1} parent=43 // pred_check
          %p532 = pneg %p169
        $region46: #{tpu_custom_call.1} parent=43 // pred_check_branch
          %534 = sbr.rel (%p532) target = $region48
        $region47: #{tpu_custom_call.1} parent=43 // pred_region
          %536 = vsyncadd %s528, 0
          %s537 = smul.addr %s20, 2
          %s538 = smul.addr %s537, 8
          %s539 = scalar_lea.hbm %s6, %s538
          %s540 = sshll.u32 %s531, 4
          %s541 = int_to_ptr.vmem [resolvable:$true] %s540
          %s542 = sshll.u32 %s539, 4
          %s543 = int_to_ptr.hbm [resolvable:$true] %s542
          %548 = dma.vmem_to_hbm [thread:$0]  %s541, 256, %s543, %s528, 128, 128, 8
        $region48: #{tpu_custom_call.1} parent=43 // pred_fallthru
          _
      $region44: #{tpu_custom_call.1} parent=5 // pred_fallthru
        _
      %p549 = scmp.le.s32.totalorder 2, %s15
      // Predicated region
      $region49: #{tpu_custom_call.1} parent=5 // pred_check
        %p550 = pneg %p549
      $region50: #{tpu_custom_call.1} parent=5 // pred_check_branch
        %552 = sbr.rel (%p550) target = $region52
      $region51: #{tpu_custom_call.1} parent=5 // pred_region
        %s553 = ssub.s32 %s15, 2
        // Predicated region
        $region53: #{tpu_custom_call.1} parent=51 // pred_check
          %p554 = pneg %p175
        $region54: #{tpu_custom_call.1} parent=51 // pred_check_branch
          %556 = sbr.rel (%p554) target = $region56
        $region55: #{tpu_custom_call.1} parent=51 // pred_region
          %s557 = sand.u32 %s160, 1
          %s558 = scalar_lea.sflag [#allocation3], %s557
          %s559 = sand.u32 %s160, 1
          %s560 = smul.addr %s559, 16
          %s561 = scalar_lea.vmem [#allocation2], %s560
          %563 = dma.done %s558, 256
        $region56: #{tpu_custom_call.1} parent=51 // pred_fallthru
          _
      $region52: #{tpu_custom_call.1} parent=5 // pred_fallthru
        _
    $region6: #{tpu_custom_call.1} parent=1 // loop_footer
      %s19 = sadd.s32 1, %s15
    $region7: #{tpu_custom_call.1} parent=1 // loop_footer_branch
      %14 = sbr.rel target = $region3
    $region8: #{tpu_custom_call.1} parent=1 // loop_exit
      _
    %564 = vsyncpa [#allocation3], 1
    %s565 = scalar_lea.sflag [#allocation3], 1
    %566 = vsyncpa %s565, 1

</llo_original>
